<compile_context>
chip_gen: v5e
topology: v5e:2x2
jax: 0.10.0
libtpu: 0.0.40
codegen_flags: <defaults>
</compile_context>

<pallas_src>
import functools
import math

import jax
import jax.numpy as jnp
from jax.experimental import pallas as pl
from jax.experimental.pallas import tpu as pltpu

_MiB = 1024 * 1024


# --------------------------------------------------------------------------------------
# Kernels
# --------------------------------------------------------------------------------------
def _gn_self_kernel(x_ref, o_ref, *, eps, inv_n):
    """xp is None: normalize each row (one batch*group) with its own statistics.

    The PyTorch reference does NOT apply scale/shift on this path (the `if self.affine:`
    block is nested inside `if xp != None:`), so neither do we.
    """
    x = x_ref[...].astype(jnp.float32)                    # (block_rows, Lp)
    mean = jnp.sum(x, axis=-1, keepdims=True) * inv_n     # lane-axis reduce (XLU); /true L
    mean_x2 = jnp.sum(x * x, axis=-1, keepdims=True) * inv_n
    var = jnp.maximum(mean_x2 - mean * mean, 0.0)         # guard f32 cancellation
    inv = jax.lax.rsqrt(var + eps)                        # EUP rsqrt (free slot)
    o_ref[...] = ((x - mean) * inv).astype(o_ref.dtype)


def _gn_xp_kernel(x_ref, xp_ref, scale_ref, shift_ref, xn_ref, xpn_ref, *, eps, inv_n, base):
    """xp provided: statistics come from xp; x_norm gets the affine, xp_norm does not."""
    x = x_ref[...].astype(jnp.float32)                    # (block_rows, Lp)
    xs = xp_ref[...].astype(jnp.float32)                  # (block_rows, Lp)
    mean = jnp.sum(xs, axis=-1, keepdims=True) * inv_n
    mean_x2 = jnp.sum(xs * xs, axis=-1, keepdims=True) * inv_n
    var = jnp.maximum(mean_x2 - mean * mean, 0.0)
    inv = jax.lax.rsqrt(var + eps)
    xn = (x - mean) * inv
    br, lp = xn.shape
    # Leading-dim-only split (layout-free): rows cycle through groups with period `base`,
    # so one tiny [base, Lp] map broadcasts over the whole block.
    xn = xn.reshape(br // base, base, lp)
    xn = xn * scale_ref[...][None, :, :] + shift_ref[...][None, :, :]
    xn_ref[...] = xn.reshape(br, lp).astype(xn_ref.dtype)
    xpn_ref[...] = ((xs - mean) * inv).astype(xpn_ref.dtype)


# --------------------------------------------------------------------------------------
# Tile selection
# --------------------------------------------------------------------------------------
def _sublane_pack(itemsize):
    """Rows per packed sublane tile: 8 for 4-byte, 16 for 2-byte, 32 for 1-byte dtypes."""
    if itemsize >= 4:
        return 8
    if itemsize == 2:
        return 16
    return 32


def _pick_block_rows(rows, base, bytes_per_row, cap_bytes, min_steps=4):
    """Row tile: multiple of `base` (packed-sublane x group period), <= cap_bytes per tile,
    leaving >= min_steps grid steps when the input is big enough, preferring an even step
    count (v7x dual-TC sharding). Rows are later zero-padded up to a multiple of the tile,
    so no divisibility of `rows` is required."""
    cap_rows = max(base, (cap_bytes // max(bytes_per_row, 1)) // base * base)
    steps_rows = max(base, (rows // min_steps) // base * base)
    block_rows = min(cap_rows, steps_rows)
    steps = -(-rows // block_rows)
    if steps > 1 and steps % 2 == 1:
        b = block_rows - base
        while b >= base:
            if (-(-rows // b)) % 2 == 0:
                block_rows = b
                break
            b -= base
    return block_rows


# --------------------------------------------------------------------------------------
# Wrapper
# --------------------------------------------------------------------------------------
@functools.partial(jax.jit, static_argnames=("groups", "eps", "affine", "block_rows"))
def custom_group_norm(x, xp=None, *, groups, scale=None, shift=None,
                      eps=1e-5, affine=True, block_rows=None):
    """Forward pass of CustomGroupNorm.

    x:  [B, C, *spatial]
    xp: optional [B, C, *spatial] — if given, statistics are computed from xp and the
        function returns (x_norm_with_affine, xp_norm); if None it returns x_norm
        (no affine, per the reference implementation).
    """
    x_shape = x.shape
    B, C = x_shape[0], x_shape[1]
    assert C % groups == 0, "channels must be divisible by groups"
    G = groups
    cpg = C // G
    hw = 1
    for d in x_shape[2:]:
        hw *= d
    L = cpg * hw
    rows = B * G
    itemsize = x.dtype.itemsize

    # Lane-dense last dim: pad to a multiple of 128 (sums over zero pad are exact).
    Lp = -(-L // 128) * 128
    # Dtype-aware sublane base x group period.
    pack = _sublane_pack(itemsize)
    base = (pack * G) // math.gcd(pack, G)

    n_streams = 2 if xp is None else 4
    cap_bytes = (4 * _MiB) if xp is None else (2 * _MiB)
    if block_rows is None:
        block_rows = _pick_block_rows(rows, base, Lp * itemsize, cap_bytes)
    assert block_rows % base == 0, "row tile must be a multiple of lcm(sublane pack, groups)"
    steps = -(-rows // block_rows)
    rows_p = steps * block_rows

    def _prep(a):
        a2 = a.reshape(rows, L)
        if Lp != L or rows_p != rows:
            a2 = jnp.pad(a2, ((0, rows_p - rows), (0, Lp - L)))
        return a2

    x2 = _prep(x)
    grid = (steps,)
    row_spec = pl.BlockSpec((block_rows, Lp), lambda i: (i, 0))
    out_struct = jax.ShapeDtypeStruct((rows_p, Lp), x.dtype)
    inv_n = 1.0 / float(L)

    # Explicit scoped-VMEM budget: actual double-buffered footprint + margin, clamped to
    # <= 48 MiB (safe on v7x's 64 MiB/TC) and >= 16 MiB. Lifts v5e's 16 MiB default scope.
    tile_bytes = block_rows * Lp * itemsize
    map_bytes = (2 * base * Lp * 4) if xp is not None else 0
    vmem_limit = int(min(48 * _MiB,
                         max(16 * _MiB, 2 * n_streams * tile_bytes + 2 * map_bytes + 4 * _MiB)))
    compiler_params = pltpu.CompilerParams(
        dimension_semantics=("parallel",),
        vmem_limit_bytes=vmem_limit,
    )

    if xp is None:
        cost = pl.CostEstimate(
            flops=7 * rows_p * Lp,
            transcendentals=rows_p,
            bytes_accessed=2 * rows_p * Lp * itemsize,
        )
        y = pl.pallas_call(
            functools.partial(_gn_self_kernel, eps=eps, inv_n=inv_n),
            out_shape=out_struct,
            grid_spec=pltpu.PrefetchScalarGridSpec(
                num_scalar_prefetch=0,
                grid=grid,
                in_specs=[row_spec],
                out_specs=row_spec,
            ),
            compiler_params=compiler_params,
            cost_estimate=cost,
        )(x2)
        return y[:rows, :L].reshape(x_shape)

    # --- xp path: statistics from xp; affine (if enabled) applied to x_norm only. ---
    xp2 = _prep(xp)

    if affine:
        assert scale is not None and shift is not None
        gscale = jnp.repeat(scale.astype(jnp.float32).reshape(G, cpg), hw, axis=1)  # (G, L)
        gshift = jnp.repeat(shift.astype(jnp.float32).reshape(G, cpg), hw, axis=1)
    else:
        gscale = jnp.ones((G, L), jnp.float32)
        gshift = jnp.zeros((G, L), jnp.float32)
    # Row r = b*G + g has group (r % G); base % G == 0 and block starts are multiples of
    # base, so one tiny [base, Lp] map is valid for every base-row period of every block.
    scale_map = jnp.pad(jnp.tile(gscale, (base // G, 1)), ((0, 0), (0, Lp - L)))
    shift_map = jnp.pad(jnp.tile(gshift, (base // G, 1)), ((0, 0), (0, Lp - L)))
    map_spec = pl.BlockSpec((base, Lp), lambda i: (0, 0))  # grid-invariant operand

    cost = pl.CostEstimate(
        flops=12 * rows_p * Lp,
        transcendentals=rows_p,
        bytes_accessed=4 * rows_p * Lp * itemsize + 2 * base * Lp * 4,
    )
    xn, xpn = pl.pallas_call(
        functools.partial(_gn_xp_kernel, eps=eps, inv_n=inv_n, base=base),
        out_shape=(out_struct, out_struct),
        grid_spec=pltpu.PrefetchScalarGridSpec(
            num_scalar_prefetch=0,
            grid=grid,
            in_specs=[row_spec, row_spec, map_spec, map_spec],
            out_specs=[row_spec, row_spec],
        ),
        compiler_params=compiler_params,
        cost_estimate=cost,
    )(x2, xp2, scale_map, shift_map)
    return xn[:rows, :L].reshape(x_shape), xpn[:rows, :L].reshape(x_shape)


# --------------------------------------------------------------------------------------
# Pure-JAX reference (mirrors the PyTorch forward exactly)
# --------------------------------------------------------------------------------------
def _reference_forward(x, xp, groups, scale, shift, eps, affine):
    x_shape = x.shape
    B, C = x_shape[0], x_shape[1]
    xg = x.reshape(B, groups, -1)
    xs = xp.reshape(B, groups, -1) if xp is not None else xg
    mean = xs.mean(axis=-1, keepdims=True)
    mean_x2 = (xs ** 2).mean(axis=-1, keepdims=True)
    var = mean_x2 - mean ** 2
    x_norm = (xg - mean) / jnp.sqrt(var + eps)
    if xp is not None:
        xp_norm = (xs - mean) / jnp.sqrt(var + eps)
        if affine:
            x_norm = x_norm.reshape(B, C, -1)
            x_norm = scale.reshape(1, -1, 1) * x_norm + shift.reshape(1, -1, 1)
        return x_norm.reshape(x_shape), xp_norm.reshape(x_shape)
    return x_norm.reshape(x_shape)


if __name__ == "__main__":
    # Small shapes consistent with the module: batch=2, channels=4, 16x16 spatial, 2 groups.
    B, C, H, W = 2, 4, 16, 16
    groups = 2

    key = jax.random.PRNGKey(0)
    kx, kxp, ks, kb = jax.random.split(key, 4)
    x = jax.random.normal(kx, (B, C, H, W), dtype=jnp.float32)
    xp = jax.random.normal(kxp, (B, C, H, W), dtype=jnp.float32)
    scale = 1.0 + 0.1 * jax.random.normal(ks, (C,), dtype=jnp.float32)
    shift = 0.1 * jax.random.normal(kb, (C,), dtype=jnp.float32)

    # Path 1: xp=None -> single normalized output (no affine, per the reference code).
    y = custom_group_norm(x, groups=groups, scale=scale, shift=shift)
    jax.block_until_ready(y)
    y_ref = _reference_forward(x, None, groups, scale, shift, 1e-5, True)
    assert y.shape == x.shape
    assert jnp.allclose(y, y_ref, atol=1e-5, rtol=1e-4)

    # Path 2: xp provided -> (x_norm with affine, xp_norm without affine).
    xn, xpn = custom_group_norm(x, xp, groups=groups, scale=scale, shift=shift)
    jax.block_until_ready((xn, xpn))
    xn_ref, xpn_ref = _reference_forward(x, xp, groups, scale, shift, 1e-5, True)
    assert xn.shape == x.shape and xpn.shape == x.shape
    assert jnp.allclose(xn, xn_ref, atol=1e-5, rtol=1e-4)
    assert jnp.allclose(xpn, xpn_ref, atol=1e-5, rtol=1e-4)

    print("KERNEL_OK")
</pallas_src>

<mosaic_0001>
module attributes {stable_mosaic.version = 11 : i64} {
  func.func @_gn_self_kernel(%arg0: i32, %arg1: memref<8x512xf32, #tpu.memory_space<vmem>>, %arg2: memref<8x512xf32, #tpu.memory_space<vmem>>) attributes {dimension_semantics = [#tpu.dimension_semantics<parallel>], iteration_bounds = array<i64: 1>, scalar_prefetch = 0 : i64, scratch_operands = 0 : i64, tpu.core_type = #tpu.core_type<tc>, window_params = [{transform_indices = @transform_0, window_bounds = array<i64: 8, 512>}, {transform_indices = @transform_1, window_bounds = array<i64: 8, 512>}]} {
    %c0 = arith.constant 0 : index
    %c0_0 = arith.constant 0 : index
    %0 = vector.load %arg1[%c0, %c0_0] : memref<8x512xf32, #tpu.memory_space<vmem>>, vector<8x512xf32>
    %cst = arith.constant dense<0.000000e+00> : vector<8xf32>
    %1 = vector.multi_reduction <add>, %0, %cst [1] : vector<8x512xf32> to vector<8xf32>
    %2 = vector.shape_cast %1 : vector<8xf32> to vector<8x1xf32>
    %cst_1 = arith.constant 0.001953125 : f32
    %3 = vector.broadcast %cst_1 : f32 to vector<8x1xf32>
    %4 = arith.mulf %2, %3 : vector<8x1xf32>
    %5 = arith.mulf %0, %0 : vector<8x512xf32>
    %cst_2 = arith.constant dense<0.000000e+00> : vector<8xf32>
    %6 = vector.multi_reduction <add>, %5, %cst_2 [1] : vector<8x512xf32> to vector<8xf32>
    %7 = vector.shape_cast %6 : vector<8xf32> to vector<8x1xf32>
    %cst_3 = arith.constant 0.001953125 : f32
    %8 = vector.broadcast %cst_3 : f32 to vector<8x1xf32>
    %9 = arith.mulf %7, %8 : vector<8x1xf32>
    %10 = arith.mulf %4, %4 : vector<8x1xf32>
    %11 = arith.subf %9, %10 : vector<8x1xf32>
    %cst_4 = arith.constant 0.000000e+00 : f32
    %12 = vector.broadcast %cst_4 : f32 to vector<8x1xf32>
    %13 = arith.maximumf %11, %12 : vector<8x1xf32>
    %cst_5 = arith.constant 9.99999974E-6 : f32
    %14 = vector.broadcast %cst_5 : f32 to vector<8x1xf32>
    %15 = arith.addf %13, %14 : vector<8x1xf32>
    %16 = math.rsqrt %15 : vector<8x1xf32>
    %17 = vector.broadcast %4 : vector<8x1xf32> to vector<8x512xf32>
    %18 = arith.subf %0, %17 : vector<8x512xf32>
    %19 = vector.broadcast %16 : vector<8x1xf32> to vector<8x512xf32>
    %20 = arith.mulf %18, %19 : vector<8x512xf32>
    %c0_6 = arith.constant 0 : index
    %c0_7 = arith.constant 0 : index
    %21 = vector.load %arg2[%c0_6, %c0_7] : memref<8x512xf32, #tpu.memory_space<vmem>>, vector<8x512xf32>
    tpu.vector_store %arg2[%c0_6, %c0_7], %20 {strides = array<i32>} : memref<8x512xf32, #tpu.memory_space<vmem>>, vector<8x512xf32>,
    return
  }
  func.func @transform_0(%arg0: i32) -> (i32, i32) {
    %c0_i32 = arith.constant 0 : i32
    %c0_i32_0 = arith.constant 0 : i32
    return %arg0, %c0_i32 : i32, i32
  }
  func.func @transform_1(%arg0: i32) -> (i32, i32) {
    %c0_i32 = arith.constant 0 : i32
    %c0_i32_0 = arith.constant 0 : i32
    return %arg0, %c0_i32 : i32, i32
  }
}

</mosaic_0001>

<llo_original>
// kernel: custom_group_norm.1
$region0: #{custom_group_norm.1}
  #allocation0 [shape = 'u32[]', space=smem, size = 0x4, offset = 0x4, fixed_abs, tag = 'smem constant byte address 0x4 - core index']
  #allocation1 [shape = 'u32[72,128]{1,0:T(1,128)}', space=vmem, size = 0x9000, scoped, tag = 'internal scratch']
  %s0 = inlined_call_operand.vmem [shape: f32[8,512], index: 0, kind: input, shape index: {}]
  %s1 = inlined_call_operand.vmem [shape: f32[8,512], index: 1, kind: output, shape index: {}]
  %s2 = sld [smem:[#allocation0]]
  $region14: #{custom_group_norm.1} parent=0
    _
  %s4 = ssub.s32 1, %s2
  %s5 = scalar_select 0, %s4, %s2
  // Predicated region
  $region2: #{custom_group_norm.1} parent=0 // pred_check
    _
  $region3: #{custom_group_norm.1} parent=0 // pred_check_branch
    %7 = sbr.rel (0) target = $region5
  $region4: #{custom_group_norm.1} parent=0 // pred_region
    _
  $region5: #{custom_group_norm.1} parent=0 // pred_fallthru
    _
  %v8 = vld [vmem:[%s0] sm:$0xff]
  %v9 = vld [vmem:[%s0 + $0x8] sm:$0xff]
  %v10 = vld [vmem:[%s0 + $0x10] sm:$0xff]
  %v11 = vld [vmem:[%s0 + $0x18] sm:$0xff]
  %v12 = vadd.f32 %v8, %v9
  %v13 = vadd.f32 %v12, %v10
  %v14 = vadd.f32 %v13, %v11
  %15 = vadd.xlane.f32.xlu0 %v14
  %v16 = vpop.xlane.xlu0 %15
  %v17 = vmul.f32 %v16, 0.001953125
  %v18 = vmul.f32 %v8, %v8
  %v19 = vmul.f32 %v9, %v9
  %v20 = vmul.f32 %v10, %v10
  %v21 = vmul.f32 %v11, %v11
  %v22 = vadd.f32 %v18, %v19
  %v23 = vadd.f32 %v22, %v20
  %v24 = vadd.f32 %v23, %v21
  %25 = vadd.xlane.f32.xlu0 %v24
  %v26 = vpop.xlane.xlu0 %25
  %v27 = vmul.f32 %v26, 0.001953125
  %v28 = vmul.f32 %v17, %v17
  %v29 = vsub.f32 %v27, %v28
  %v30 = vmax.f32 %v29, 0.0
  %v31 = vadd.f32 %v30, 1e-05
  %v32 = vrsqrt.pop %v31
  %v33 = vmul.f32 %v32, %v31
  %v34 = vmul.f32 %v33, %v32
  %v35 = vmul.f32 0.5, %v34
  %v36 = vsub.f32 1.5, %v35
  %v37 = vmul.f32 %v32, %v36
  %vm38 = vweird.f32 %v31
  %vm39 = vweird.f32 %v32
  %vm40 = vmor %vm38, %vm39
  %v41 = vsel %vm40, %v32, %v37
  %v42 = vsub.f32 %v8, %v17
  %v43 = vsub.f32 %v9, %v17
  %v44 = vsub.f32 %v10, %v17
  %v45 = vsub.f32 %v11, %v17
  %v46 = vmul.f32 %v42, %v41
  %v47 = vmul.f32 %v43, %v41
  %v48 = vmul.f32 %v44, %v41
  %v49 = vmul.f32 %v45, %v41
  %50 = vst [vmem:[%s1] sm:$0xff] %v46
  %51 = vst [vmem:[%s1 + $0x8] sm:$0xff] %v47
  %52 = vst [vmem:[%s1 + $0x10] sm:$0xff] %v48
  %53 = vst [vmem:[%s1 + $0x18] sm:$0xff] %v49
  // Predicated region
  $region6: #{custom_group_norm.1} parent=0 // pred_check
    _
  $region7: #{custom_group_norm.1} parent=0 // pred_check_branch
    %55 = sbr.rel (0) target = $region9
  $region8: #{custom_group_norm.1} parent=0 // pred_region
    _
  $region9: #{custom_group_norm.1} parent=0 // pred_fallthru
    _
  // Predicated region
  $region10: #{custom_group_norm.1} parent=0 // pred_check
    _
  $region11: #{custom_group_norm.1} parent=0 // pred_check_branch
    %57 = sbr.rel (0) target = $region13
  $region12: #{custom_group_norm.1} parent=0 // pred_region
    _
  $region13: #{custom_group_norm.1} parent=0 // pred_fallthru
    _

</llo_original>
